<compile_context>
chip_gen: v6e
topology: v6e:2x2x1
jax: 0.10.0
libtpu: 0.0.40
codegen_flags: <defaults>
</compile_context>

<pallas_src>
import functools

import jax
import jax.numpy as jnp
from jax import lax
from jax.experimental import pallas as pl
from jax.experimental.pallas import tpu as pltpu

# YOLACT constants (BGR order); MAX_SIZE shrunk for the small synthetic run.
MEANS = (103.94, 116.78, 123.68)
STD = (57.38, 57.12, 58.40)
MAX_SIZE = 32

# Per-output-channel (RGB order = flipped BGR) scale/bias, baked as Python floats.
_SCALE_RGB = tuple(1.0 / STD[c] for c in (2, 1, 0))
_BIAS_RGB = tuple(MEANS[c] / STD[c] for c in (2, 1, 0))


def _interp_matrix(out_size: int, in_size: int) -> jnp.ndarray:
    """Row-stochastic bilinear interpolation matrix matching PyTorch
    F.interpolate(mode='bilinear', align_corners=False)."""
    scale = in_size / out_size
    src = (jnp.arange(out_size, dtype=jnp.float32) + 0.5) * scale - 0.5
    src = jnp.maximum(src, 0.0)                      # PyTorch clamps negatives to 0
    i0 = jnp.floor(src).astype(jnp.int32)
    i0 = jnp.minimum(i0, in_size - 1)
    i1 = jnp.minimum(i0 + 1, in_size - 1)
    w1 = src - i0.astype(jnp.float32)
    w0 = 1.0 - w1
    rows = jnp.arange(out_size)
    m = jnp.zeros((out_size, in_size), jnp.float32)
    m = m.at[rows, i0].add(w0)
    m = m.at[rows, i1].add(w1)
    return m


def _resize_normalize_kernel(x_ref, w_ref, o_ref):
    # x_ref: [3, H*W]        raw pixels, rows already in output (RGB) order
    # w_ref: [H*W, MAX*MAX]  combined bilinear operator (resident across grid steps)
    # o_ref: [3, MAX*MAX]    lane-dense output block
    resized = jnp.dot(x_ref[...], w_ref[...], preferred_element_type=jnp.float32)

    # Per-channel normalization baked from compile-time constants: select by row index.
    ch = lax.broadcasted_iota(jnp.int32, (3, 1), 0)
    scale = jnp.where(ch == 0, _SCALE_RGB[0],
                      jnp.where(ch == 1, _SCALE_RGB[1], _SCALE_RGB[2]))
    bias = jnp.where(ch == 0, _BIAS_RGB[0],
                     jnp.where(ch == 1, _BIAS_RGB[1], _BIAS_RGB[2]))
    o_ref[...] = resized * scale - bias


@functools.partial(jax.jit, static_argnames=("max_size",))
def fast_base_transform(img_nhwc: jnp.ndarray, max_size: int = MAX_SIZE) -> jnp.ndarray:
    """img_nhwc: [N, H, W, 3] float (BGR). Returns [N, 3, max_size, max_size] (RGB, normalized)."""
    N, H, W, C = img_nhwc.shape
    if C != 3:
        raise ValueError("FastBaseTransform expects 3 channels")
    hw = H * W
    out_hw = max_size * max_size

    # NHWC(BGR) -> NCHW, BGR->RGB flip, flatten spatial: a single fused XLA copy.
    # TODO(synk): fuse this transpose into the pallas_call at production sizes.
    x = jnp.transpose(img_nhwc.astype(jnp.float32), (0, 3, 1, 2))[:, ::-1, :, :]
    x = x.reshape(N, 3, hw)

    # Combined bilinear operator: wk[h*W + w, ho*max + wo] = Wh[ho, h] * Ww[wo, w]
    wh = _interp_matrix(max_size, H)                 # [max, H]
    ww = _interp_matrix(max_size, W)                 # [max, W]
    wk = jnp.einsum("oh,pw->hwop", wh, ww).reshape(hw, out_hw)

    out_flat = pl.pallas_call(
        _resize_normalize_kernel,
        out_shape=jax.ShapeDtypeStruct((N, 3, out_hw), jnp.float32),
        grid_spec=pltpu.PrefetchScalarGridSpec(
            num_scalar_prefetch=0,
            grid=(N,),                                           # one step per image
            in_specs=[
                pl.BlockSpec((None, 3, hw), lambda n: (n, 0, 0)),       # pixels for image n
                pl.BlockSpec((hw, out_hw), lambda n: (0, 0)),           # resident operator
            ],
            out_specs=pl.BlockSpec((None, 3, out_hw), lambda n: (n, 0, 0)),  # lane-dense
        ),
        compiler_params=pltpu.CompilerParams(
            dimension_semantics=("parallel",),       # batch axis splits across TCs on v7x
        ),
    )(x, wk)

    # Free, contiguous reshape back to NCHW planes.
    return out_flat.reshape(N, 3, max_size, max_size)


# ---------------------------------------------------------------------------
# Independent gather/lerp reference that mirrors the PyTorch module op-by-op.
# ---------------------------------------------------------------------------
def _axis_lerp_params(out_size, in_size):
    scale = in_size / out_size
    src = (jnp.arange(out_size, dtype=jnp.float32) + 0.5) * scale - 0.5
    src = jnp.maximum(src, 0.0)
    i0 = jnp.minimum(jnp.floor(src).astype(jnp.int32), in_size - 1)
    i1 = jnp.minimum(i0 + 1, in_size - 1)
    frac = src - i0.astype(jnp.float32)
    return i0, i1, frac


def _reference(img_nhwc, max_size=MAX_SIZE):
    x = jnp.transpose(img_nhwc.astype(jnp.float32), (0, 3, 1, 2))   # NCHW, BGR
    _, _, H, W = x.shape
    r0, r1, fr = _axis_lerp_params(max_size, H)
    c0, c1, fc = _axis_lerp_params(max_size, W)
    rows = (x[:, :, r0, :] * (1.0 - fr)[None, None, :, None]
            + x[:, :, r1, :] * fr[None, None, :, None])
    resized = (rows[:, :, :, c0] * (1.0 - fc)[None, None, None, :]
               + rows[:, :, :, c1] * fc[None, None, None, :])
    mean = jnp.asarray(MEANS, jnp.float32)[None, :, None, None]
    std = jnp.asarray(STD, jnp.float32)[None, :, None, None]
    return ((resized - mean) / std)[:, ::-1, :, :]


if __name__ == "__main__":
    key = jax.random.PRNGKey(0)
    # Small synthetic batch of uint8-valued "images": N=2, 16x16 spatial, 3 (BGR) channels.
    img = jnp.floor(jax.random.uniform(key, (2, 16, 16, 3), dtype=jnp.float32) * 256.0)

    out = jax.block_until_ready(fast_base_transform(img))
    ref = _reference(img)

    assert out.shape == (2, 3, MAX_SIZE, MAX_SIZE), out.shape
    max_err = float(jnp.max(jnp.abs(out - ref)))
    assert max_err < 1e-4, max_err
    print("KERNEL_OK")
</pallas_src>

<mosaic_0001>
module attributes {stable_mosaic.version = 11 : i64} {
  func.func private @main(%arg0: i32) attributes {dimension_semantics = [#tpu.dimension_semantics<core_parallel>], iteration_bounds = array<i64: 2>, tpu.core_type = #tpu.core_type<sc_scalar_subcore>, window_params = []} {
    return
  }
}

module attributes {stable_mosaic.version = 11 : i64} {
  func.func private @main(%arg0: i32) attributes {dimension_semantics = [#tpu.dimension_semantics<core_parallel>], iteration_bounds = array<i64: 2>, tpu.core_type = #tpu.core_type<sc_scalar_subcore>, window_params = []} {
    return
  }
}

module attributes {stable_mosaic.version = 11 : i64} {
  func.func @_resize_normalize_kernel(%arg0: i32, %arg1: memref<1x3x256xf32, #tpu.memory_space<vmem>>, %arg2: memref<256x1024xf32, #tpu.memory_space<vmem>>, %arg3: memref<1x3x1024xf32, #tpu.memory_space<vmem>>) attributes {dimension_semantics = [#tpu.dimension_semantics<parallel>], iteration_bounds = array<i64: 2>, scalar_prefetch = 0 : i64, scratch_operands = 0 : i64, tpu.core_type = #tpu.core_type<tc>, window_params = [{transform_indices = @transform_0, window_bounds = array<i64: 1, 3, 256>}, {pipeline_mode = #tpu.pipeline_mode<synchronous>, transform_indices = @transform_1, window_bounds = array<i64: 256, 1024>}, {transform_indices = @transform_2, window_bounds = array<i64: 1, 3, 1024>}]} {
    %c0 = arith.constant 0 : index
    %c0_0 = arith.constant 0 : index
    %c0_1 = arith.constant 0 : index
    %0 = vector.load %arg1[%c0, %c0_0, %c0_1] : memref<1x3x256xf32, #tpu.memory_space<vmem>>, vector<1x3x256xf32>
    %1 = vector.shape_cast %0 : vector<1x3x256xf32> to vector<3x256xf32>
    %c0_2 = arith.constant 0 : index
    %c0_3 = arith.constant 0 : index
    %2 = vector.load %arg2[%c0_2, %c0_3] : memref<256x1024xf32, #tpu.memory_space<vmem>>, vector<256x1024xf32>
    %cst = arith.constant dense<0.000000e+00> : vector<3x1024xf32>
    %3 = tpu.matmul %1, %2, %cst {dimension_numbers = #tpu.dot_dimension_numbers<[1], [0], [0], [1], [0, 0, 1, 1], [], []>} : vector<3x256xf32>, vector<256x1024xf32>, vector<3x1024xf32> -> vector<3x1024xf32>
    %4 = tpu.iota {dimensions = array<i32: 0>} : vector<3x1xi32>
    %c0_i32 = arith.constant 0 : i32
    %5 = vector.broadcast %c0_i32 : i32 to vector<3x1xi32>
    %6 = arith.cmpi eq, %4, %5 : vector<3x1xi32>
    %c1_i32 = arith.constant 1 : i32
    %7 = vector.broadcast %c1_i32 : i32 to vector<3x1xi32>
    %8 = arith.cmpi eq, %4, %7 : vector<3x1xi32>
    %cst_4 = arith.constant 0.0175070036 : f32
    %cst_5 = arith.constant 0.0174276754 : f32
    %9 = vector.broadcast %cst_4 : f32 to vector<3x1xf32>
    %10 = vector.broadcast %cst_5 : f32 to vector<3x1xf32>
    %11 = arith.select %8, %9, %10 : vector<3x1xi1>, vector<3x1xf32>
    %cst_6 = arith.constant 0.0171232875 : f32
    %12 = vector.broadcast %cst_6 : f32 to vector<3x1xf32>
    %13 = arith.select %6, %12, %11 : vector<3x1xi1>, vector<3x1xf32>
    %c0_i32_7 = arith.constant 0 : i32
    %14 = vector.broadcast %c0_i32_7 : i32 to vector<3x1xi32>
    %15 = arith.cmpi eq, %4, %14 : vector<3x1xi32>
    %c1_i32_8 = arith.constant 1 : i32
    %16 = vector.broadcast %c1_i32_8 : i32 to vector<3x1xi32>
    %17 = arith.cmpi eq, %4, %16 : vector<3x1xi32>
    %cst_9 = arith.constant 2.04446769 : f32
    %cst_10 = arith.constant 1.8114326 : f32
    %18 = vector.broadcast %cst_9 : f32 to vector<3x1xf32>
    %19 = vector.broadcast %cst_10 : f32 to vector<3x1xf32>
    %20 = arith.select %17, %18, %19 : vector<3x1xi1>, vector<3x1xf32>
    %cst_11 = arith.constant 2.1178081 : f32
    %21 = vector.broadcast %cst_11 : f32 to vector<3x1xf32>
    %22 = arith.select %15, %21, %20 : vector<3x1xi1>, vector<3x1xf32>
    %23 = vector.broadcast %13 : vector<3x1xf32> to vector<3x1024xf32>
    %24 = arith.mulf %3, %23 : vector<3x1024xf32>
    %25 = vector.broadcast %22 : vector<3x1xf32> to vector<3x1024xf32>
    %26 = arith.subf %24, %25 : vector<3x1024xf32>
    %c0_12 = arith.constant 0 : index
    %c0_13 = arith.constant 0 : index
    %c0_14 = arith.constant 0 : index
    %27 = vector.load %arg3[%c0_12, %c0_13, %c0_14] : memref<1x3x1024xf32, #tpu.memory_space<vmem>>, vector<1x3x1024xf32>
    %28 = vector.shape_cast %27 : vector<1x3x1024xf32> to vector<3x1024xf32>
    %29 = vector.shape_cast %26 : vector<3x1024xf32> to vector<1x3x1024xf32>
    tpu.vector_store %arg3[%c0_12, %c0_13, %c0_14], %29 {strides = array<i32>} : memref<1x3x1024xf32, #tpu.memory_space<vmem>>, vector<1x3x1024xf32>,
    return
  }
  func.func @transform_0(%arg0: i32) -> (i32, i32, i32) {
    %c0_i32 = arith.constant 0 : i32
    %c0_i32_0 = arith.constant 0 : i32
    %c0_i32_1 = arith.constant 0 : i32
    return %arg0, %c0_i32, %c0_i32_0 : i32, i32, i32
  }
  func.func @transform_1(%arg0: i32) -> (i32, i32) {
    %c0_i32 = arith.constant 0 : i32
    %c0_i32_0 = arith.constant 0 : i32
    %c0_i32_1 = arith.constant 0 : i32
    return %c0_i32, %c0_i32_0 : i32, i32
  }
  func.func @transform_2(%arg0: i32) -> (i32, i32, i32) {
    %c0_i32 = arith.constant 0 : i32
    %c0_i32_0 = arith.constant 0 : i32
    %c0_i32_1 = arith.constant 0 : i32
    return %arg0, %c0_i32, %c0_i32_0 : i32, i32, i32
  }
}

</mosaic_0001>

<llo_original>
// kernel: fast_base_transform.1
$region0: #{fast_base_transform.1}
  #allocation0 [shape = 'u32[]', space=smem, size = 0x4, offset = 0x4, fixed_abs, tag = 'smem constant byte address 0x4 - core index']
  #allocation1 [shape = 'u32[144,128]{1,0:T(1,128)}', space=vmem, size = 0x12000, scoped, tag = 'internal scratch']
  %s0 = inlined_call_operand.vmem [shape: f32[2,3,256], index: 0, kind: input, shape index: {}]
  %s1 = inlined_call_operand.vmem [shape: f32[256,1024], index: 1, kind: input, shape index: {}]
  %s2 = inlined_call_operand.vmem [shape: f32[2,3,1024], index: 2, kind: output, shape index: {}]
  %s3 = sld [smem:[#allocation0]]
  $region41: #{fast_base_transform.1} parent=0
    _
  %s5 = ssub.s32 1, %s3
  %s6 = scalar_select 0, %s5, %s3
  loop: start=0, step=1, limit=4
  $region2: #{fast_base_transform.1} parent=0 // loop_pre_header
    _
  $region3: #{fast_base_transform.1} parent=0 // loop_header
    %s8 = sphi 0, %s12
    %p9 = scmp.ge.s32.totalorder %s8, 4
    %s18 = sphi 0, %s20
    %s21 = sphi 0, %s18
    %s22 = sphi 0, %s21
    %s38 = sphi 0, %s22
    %s42 = sphi 0, %s42
    %s44 = sphi 0, %s42
    %s45 = sphi 0, %s44
    %s59 = sphi 0, %s45
    %s65 = sphi 0, %s67
    %s68 = sphi 0, %s65
    %s69 = sphi 0, %s68
    %s85 = sphi 0, %s69
  $region4: #{fast_base_transform.1} parent=0 // loop_header_branch
    %11 = sbr.rel (%p9) target = $region8
  $region5: #{fast_base_transform.1} parent=0 // loop_body
    %s13 = ssub.s32 %s8, 1
    %s14 = ssub.s32 %s8, 2
    %s15 = sadd.s32 %s8, 1
    %s16 = ssub.s32 %s8, %s15
    %p17 = scmp.eq.s32.totalorder %s16, 0
    %s19 = sadd.s32 %s18, 1
    %s20 = scalar_select %p17, %s18, %s19
    %p23 = pneg %p17
    %p24 = scmp.eq.s32.totalorder %s8, 1
    %p25 = por %p23, %p24
    %p26 = scmp.ne.s32.totalorder %s18, %s21
    %p27 = scmp.eq.s32.totalorder %s8, 0
    %p28 = por %p26, %p27
    %p29 = scmp.ne.s32.totalorder %s18, %s21
    %p30 = scmp.eq.s32.totalorder %s13, 1
    %p31 = por %p29, %p30
    %p32 = scmp.ne.s32.totalorder %s21, %s22
    %p33 = scmp.eq.s32.totalorder %s13, 0
    %p34 = por %p32, %p33
    %p35 = scmp.ne.s32.totalorder %s21, %s22
    %p36 = scmp.eq.s32.totalorder %s14, 1
    %p37 = por %p35, %p36
    %p39 = scmp.ne.s32.totalorder %s22, %s38
    %p40 = scmp.eq.s32.totalorder %s14, 0
    %p41 = por %p39, %p40
    %s43 = sadd.s32 %s42, 1
    %p46 = scmp.eq.s32.totalorder %s8, 1
    %p47 = scmp.ne.s32.totalorder %s42, %s44
    %p48 = scmp.eq.s32.totalorder %s8, 0
    %p49 = por %p47, %p48
    %p50 = scmp.ne.s32.totalorder %s42, %s44
    %p51 = scmp.eq.s32.totalorder %s13, 1
    %p52 = por %p50, %p51
    %p53 = scmp.ne.s32.totalorder %s44, %s45
    %p54 = scmp.eq.s32.totalorder %s13, 0
    %p55 = por %p53, %p54
    %p56 = scmp.ne.s32.totalorder %s44, %s45
    %p57 = scmp.eq.s32.totalorder %s14, 1
    %p58 = por %p56, %p57
    %p60 = scmp.ne.s32.totalorder %s45, %s59
    %p61 = scmp.eq.s32.totalorder %s14, 0
    %p62 = por %p60, %p61
    %s63 = ssub.s32 %s8, %s15
    %p64 = scmp.eq.s32.totalorder %s63, 0
    %s66 = sadd.s32 %s65, 1
    %s67 = scalar_select %p64, %s65, %s66
    %p70 = pneg %p64
    %p71 = scmp.eq.s32.totalorder %s8, 1
    %p72 = por %p70, %p71
    %p73 = scmp.ne.s32.totalorder %s65, %s68
    %p74 = scmp.eq.s32.totalorder %s8, 0
    %p75 = por %p73, %p74
    %p76 = scmp.ne.s32.totalorder %s65, %s68
    %p77 = scmp.eq.s32.totalorder %s13, 1
    %p78 = por %p76, %p77
    %p79 = scmp.ne.s32.totalorder %s68, %s69
    %p80 = scmp.eq.s32.totalorder %s13, 0
    %p81 = por %p79, %p80
    %p82 = scmp.ne.s32.totalorder %s68, %s69
    %p83 = scmp.eq.s32.totalorder %s14, 1
    %p84 = por %p82, %p83
    %p86 = scmp.ne.s32.totalorder %s69, %s85
    %p87 = scmp.eq.s32.totalorder %s14, 0
    %p88 = por %p86, %p87
    %p89 = scmp.le.s32.totalorder 1, %s8
    %p90 = scmp.lt.s32.totalorder %s8, 3
    %p91 = pnand %p89, %p90
    %p92 = pneg %p91
    // Predicated region
    $region9: #{fast_base_transform.1} parent=5 // pred_check
      _
    $region10: #{fast_base_transform.1} parent=5 // pred_check_branch
      %94 = sbr.rel (%p91) target = $region12
    $region11: #{fast_base_transform.1} parent=5 // pred_region
      %s95 = ssub.s32 %s8, 1
      // Predicated region
      $region13: #{fast_base_transform.1} parent=11 // pred_check
        %p96 = pneg %p55
      $region14: #{fast_base_transform.1} parent=11 // pred_check_branch
        %98 = sbr.rel (%p96) target = $region16
      $region15: #{fast_base_transform.1} parent=11 // pred_region
        _
      $region16: #{fast_base_transform.1} parent=11 // pred_fallthru
        _
    $region12: #{fast_base_transform.1} parent=5 // pred_fallthru
      _
    %p99 = scmp.lt.s32.totalorder %s8, 2
    // Predicated region
    $region17: #{fast_base_transform.1} parent=5 // pred_check
      %p100 = pneg %p99
    $region18: #{fast_base_transform.1} parent=5 // pred_check_branch
      %102 = sbr.rel (%p100) target = $region20
    $region19: #{fast_base_transform.1} parent=5 // pred_region
      // Predicated region
      $region21: #{fast_base_transform.1} parent=19 // pred_check
        %p103 = pneg %p28
      $region22: #{fast_base_transform.1} parent=19 // pred_check_branch
        %105 = sbr.rel (%p103) target = $region24
      $region23: #{fast_base_transform.1} parent=19 // pred_region
        %p106 = scmp.lt.s32.totalorder %s8, 1
        %s107 = scalar_select %p106, %s8, 1
        %s108 = smul.addr %s107, 2
        %s109 = smul.addr %s108, 4
        %s110 = scalar_lea.vmem %s0, %s109
      $region24: #{fast_base_transform.1} parent=19 // pred_fallthru
        _
    $region20: #{fast_base_transform.1} parent=5 // pred_fallthru
      _
    %p111 = scmp.le.s32.totalorder 1, %s8
    %p112 = scmp.lt.s32.totalorder %s8, 3
    %p113 = pnand %p111, %p112
    %p114 = pneg %p113
    // Predicated region
    $region25: #{fast_base_transform.1} parent=5 // pred_check
      _
    $region26: #{fast_base_transform.1} parent=5 // pred_check_branch
      %116 = sbr.rel (%p113) target = $region28
    $region27: #{fast_base_transform.1} parent=5 // pred_region
      %s117 = ssub.s32 %s8, 1
      %p118 = scmp.lt.s32.totalorder %s13, 1
      %s119 = scalar_select %p118, %s13, 1
      %s120 = smul.addr %s119, 2
      %s121 = smul.addr %s120, 4
      %s122 = scalar_lea.vmem %s0, %s121
      %p123 = pneg %p34
      %p124 = pneg %p31
      %p125 = pneg %p55
      %p126 = pneg %p52
      %p127 = pneg %p81
      %p128 = pneg %p78
      %p129 = scmp.lt.s32.totalorder %s13, 1
      %s130 = scalar_select %p129, %s13, 1
      %s131 = smul.addr %s130, 8
      %s132 = smul.addr %s131, 4
      %s133 = scalar_lea.vmem %s2, %s132
      %p134 = scmp.lt.s32.totalorder %s13, 1
      %s135 = scalar_select %p134, %s13, 1
      %s136 = smul.addr %s135, 2
      %s137 = smul.addr %s136, 4
      %s138 = scalar_lea.vmem %s0, %s137
      %p139 = scmp.lt.s32.totalorder %s13, 1
      %s140 = scalar_select %p139, %s13, 1
      %s141 = smul.addr %s140, 8
      %s142 = smul.addr %s141, 4
      %s143 = scalar_lea.vmem %s2, %s142
      %v144 = vld [vmem:[%s138] sm:$0x77]
      %v145 = vld [vmem:[%s1] sm:$0xff]
      %v146 = vld [vmem:[%s1 + $0x8] sm:$0xff]
      %v147 = vld [vmem:[%s1 + $0x10] sm:$0xff]
      %v148 = vld [vmem:[%s1 + $0x18] sm:$0xff]
      %v149 = vld [vmem:[%s1 + $0x20] sm:$0xff]
      %v150 = vld [vmem:[%s1 + $0x28] sm:$0xff]
      %v151 = vld [vmem:[%s1 + $0x30] sm:$0xff]
      %v152 = vld [vmem:[%s1 + $0x38] sm:$0xff]
      %v153 = vld [vmem:[%s1 + $0x40] sm:$0xff]
      %v154 = vld [vmem:[%s1 + $0x48] sm:$0xff]
      %v155 = vld [vmem:[%s1 + $0x50] sm:$0xff]
      %v156 = vld [vmem:[%s1 + $0x58] sm:$0xff]
      %v157 = vld [vmem:[%s1 + $0x60] sm:$0xff]
      %v158 = vld [vmem:[%s1 + $0x68] sm:$0xff]
      %v159 = vld [vmem:[%s1 + $0x70] sm:$0xff]
      %v160 = vld [vmem:[%s1 + $0x78] sm:$0xff]
      %v161 = vld [vmem:[%s1 + $0x80] sm:$0xff]
      %v162 = vld [vmem:[%s1 + $0x88] sm:$0xff]
      %v163 = vld [vmem:[%s1 + $0x90] sm:$0xff]
      %v164 = vld [vmem:[%s1 + $0x98] sm:$0xff]
      %v165 = vld [vmem:[%s1 + $0xa0] sm:$0xff]
      %v166 = vld [vmem:[%s1 + $0xa8] sm:$0xff]
      %v167 = vld [vmem:[%s1 + $0xb0] sm:$0xff]
      %v168 = vld [vmem:[%s1 + $0xb8] sm:$0xff]
      %v169 = vld [vmem:[%s1 + $0xc0] sm:$0xff]
      %v170 = vld [vmem:[%s1 + $0xc8] sm:$0xff]
      %v171 = vld [vmem:[%s1 + $0xd0] sm:$0xff]
      %v172 = vld [vmem:[%s1 + $0xd8] sm:$0xff]
      %v173 = vld [vmem:[%s1 + $0xe0] sm:$0xff]
      %v174 = vld [vmem:[%s1 + $0xe8] sm:$0xff]
      %v175 = vld [vmem:[%s1 + $0xf0] sm:$0xff]
      %v176 = vld [vmem:[%s1 + $0xf8] sm:$0xff]
      %v177 = vld [vmem:[%s1 + $0x100] sm:$0xff]
      %v178 = vld [vmem:[%s1 + $0x108] sm:$0xff]
      %v179 = vld [vmem:[%s1 + $0x110] sm:$0xff]
      %v180 = vld [vmem:[%s1 + $0x118] sm:$0xff]
      %v181 = vld [vmem:[%s1 + $0x120] sm:$0xff]
      %v182 = vld [vmem:[%s1 + $0x128] sm:$0xff]
      %v183 = vld [vmem:[%s1 + $0x130] sm:$0xff]
      %v184 = vld [vmem:[%s1 + $0x138] sm:$0xff]
      %v185 = vld [vmem:[%s1 + $0x140] sm:$0xff]
      %v186 = vld [vmem:[%s1 + $0x148] sm:$0xff]
      %v187 = vld [vmem:[%s1 + $0x150] sm:$0xff]
      %v188 = vld [vmem:[%s1 + $0x158] sm:$0xff]
      %v189 = vld [vmem:[%s1 + $0x160] sm:$0xff]
      %v190 = vld [vmem:[%s1 + $0x168] sm:$0xff]
      %v191 = vld [vmem:[%s1 + $0x170] sm:$0xff]
      %v192 = vld [vmem:[%s1 + $0x178] sm:$0xff]
      %v193 = vld [vmem:[%s1 + $0x180] sm:$0xff]
      %v194 = vld [vmem:[%s1 + $0x188] sm:$0xff]
      %v195 = vld [vmem:[%s1 + $0x190] sm:$0xff]
      %v196 = vld [vmem:[%s1 + $0x198] sm:$0xff]
      %v197 = vld [vmem:[%s1 + $0x1a0] sm:$0xff]
      %v198 = vld [vmem:[%s1 + $0x1a8] sm:$0xff]
      %v199 = vld [vmem:[%s1 + $0x1b0] sm:$0xff]
      %v200 = vld [vmem:[%s1 + $0x1b8] sm:$0xff]
      %v201 = vld [vmem:[%s1 + $0x1c0] sm:$0xff]
      %v202 = vld [vmem:[%s1 + $0x1c8] sm:$0xff]
      %v203 = vld [vmem:[%s1 + $0x1d0] sm:$0xff]
      %v204 = vld [vmem:[%s1 + $0x1d8] sm:$0xff]
      %v205 = vld [vmem:[%s1 + $0x1e0] sm:$0xff]
      %v206 = vld [vmem:[%s1 + $0x1e8] sm:$0xff]
      %v207 = vld [vmem:[%s1 + $0x1f0] sm:$0xff]
      %v208 = vld [vmem:[%s1 + $0x1f8] sm:$0xff]
      %v209 = vld [vmem:[%s1 + $0x200] sm:$0xff]
      %v210 = vld [vmem:[%s1 + $0x208] sm:$0xff]
      %v211 = vld [vmem:[%s1 + $0x210] sm:$0xff]
      %v212 = vld [vmem:[%s1 + $0x218] sm:$0xff]
      %v213 = vld [vmem:[%s1 + $0x220] sm:$0xff]
      %v214 = vld [vmem:[%s1 + $0x228] sm:$0xff]
      %v215 = vld [vmem:[%s1 + $0x230] sm:$0xff]
      %v216 = vld [vmem:[%s1 + $0x238] sm:$0xff]
      %v217 = vld [vmem:[%s1 + $0x240] sm:$0xff]
      %v218 = vld [vmem:[%s1 + $0x248] sm:$0xff]
      %v219 = vld [vmem:[%s1 + $0x250] sm:$0xff]
      %v220 = vld [vmem:[%s1 + $0x258] sm:$0xff]
      %v221 = vld [vmem:[%s1 + $0x260] sm:$0xff]
      %v222 = vld [vmem:[%s1 + $0x268] sm:$0xff]
      %v223 = vld [vmem:[%s1 + $0x270] sm:$0xff]
      %v224 = vld [vmem:[%s1 + $0x278] sm:$0xff]
      %v225 = vld [vmem:[%s1 + $0x280] sm:$0xff]
      %v226 = vld [vmem:[%s1 + $0x288] sm:$0xff]
      %v227 = vld [vmem:[%s1 + $0x290] sm:$0xff]
      %v228 = vld [vmem:[%s1 + $0x298] sm:$0xff]
      %v229 = vld [vmem:[%s1 + $0x2a0] sm:$0xff]
      %v230 = vld [vmem:[%s1 + $0x2a8] sm:$0xff]
      %v231 = vld [vmem:[%s1 + $0x2b0] sm:$0xff]
      %v232 = vld [vmem:[%s1 + $0x2b8] sm:$0xff]
      %v233 = vld [vmem:[%s1 + $0x2c0] sm:$0xff]
      %v234 = vld [vmem:[%s1 + $0x2c8] sm:$0xff]
      %v235 = vld [vmem:[%s1 + $0x2d0] sm:$0xff]
      %v236 = vld [vmem:[%s1 + $0x2d8] sm:$0xff]
      %v237 = vld [vmem:[%s1 + $0x2e0] sm:$0xff]
      %v238 = vld [vmem:[%s1 + $0x2e8] sm:$0xff]
      %v239 = vld [vmem:[%s1 + $0x2f0] sm:$0xff]
      %v240 = vld [vmem:[%s1 + $0x2f8] sm:$0xff]
      %v241 = vld [vmem:[%s1 + $0x300] sm:$0xff]
      %v242 = vld [vmem:[%s1 + $0x308] sm:$0xff]
      %v243 = vld [vmem:[%s1 + $0x310] sm:$0xff]
      %v244 = vld [vmem:[%s1 + $0x318] sm:$0xff]
      %v245 = vld [vmem:[%s1 + $0x320] sm:$0xff]
      %v246 = vld [vmem:[%s1 + $0x328] sm:$0xff]
      %v247 = vld [vmem:[%s1 + $0x330] sm:$0xff]
      %v248 = vld [vmem:[%s1 + $0x338] sm:$0xff]
      %v249 = vld [vmem:[%s1 + $0x340] sm:$0xff]
      %v250 = vld [vmem:[%s1 + $0x348] sm:$0xff]
      %v251 = vld [vmem:[%s1 + $0x350] sm:$0xff]
      %v252 = vld [vmem:[%s1 + $0x358] sm:$0xff]
      %v253 = vld [vmem:[%s1 + $0x360] sm:$0xff]
      %v254 = vld [vmem:[%s1 + $0x368] sm:$0xff]
      %v255 = vld [vmem:[%s1 + $0x370] sm:$0xff]
      %v256 = vld [vmem:[%s1 + $0x378] sm:$0xff]
      %v257 = vld [vmem:[%s1 + $0x380] sm:$0xff]
      %v258 = vld [vmem:[%s1 + $0x388] sm:$0xff]
      %v259 = vld [vmem:[%s1 + $0x390] sm:$0xff]
      %v260 = vld [vmem:[%s1 + $0x398] sm:$0xff]
      %v261 = vld [vmem:[%s1 + $0x3a0] sm:$0xff]
      %v262 = vld [vmem:[%s1 + $0x3a8] sm:$0xff]
      %v263 = vld [vmem:[%s1 + $0x3b0] sm:$0xff]
      %v264 = vld [vmem:[%s1 + $0x3b8] sm:$0xff]
      %v265 = vld [vmem:[%s1 + $0x3c0] sm:$0xff]
      %v266 = vld [vmem:[%s1 + $0x3c8] sm:$0xff]
      %v267 = vld [vmem:[%s1 + $0x3d0] sm:$0xff]
      %v268 = vld [vmem:[%s1 + $0x3d8] sm:$0xff]
      %v269 = vld [vmem:[%s1 + $0x3e0] sm:$0xff]
      %v270 = vld [vmem:[%s1 + $0x3e8] sm:$0xff]
      %v271 = vld [vmem:[%s1 + $0x3f0] sm:$0xff]
      %v272 = vld [vmem:[%s1 + $0x3f8] sm:$0xff]
      %v273 = vld [vmem:[%s1 + $0x400] sm:$0xff]
      %v274 = vld [vmem:[%s1 + $0x408] sm:$0xff]
      %v275 = vld [vmem:[%s1 + $0x410] sm:$0xff]
      %v276 = vld [vmem:[%s1 + $0x418] sm:$0xff]
      %v277 = vld [vmem:[%s1 + $0x420] sm:$0xff]
      %v278 = vld [vmem:[%s1 + $0x428] sm:$0xff]
      %v279 = vld [vmem:[%s1 + $0x430] sm:$0xff]
      %v280 = vld [vmem:[%s1 + $0x438] sm:$0xff]
      %v281 = vld [vmem:[%s1 + $0x440] sm:$0xff]
      %v282 = vld [vmem:[%s1 + $0x448] sm:$0xff]
      %v283 = vld [vmem:[%s1 + $0x450] sm:$0xff]
      %v284 = vld [vmem:[%s1 + $0x458] sm:$0xff]
      %v285 = vld [vmem:[%s1 + $0x460] sm:$0xff]
      %v286 = vld [vmem:[%s1 + $0x468] sm:$0xff]
      %v287 = vld [vmem:[%s1 + $0x470] sm:$0xff]
      %v288 = vld [vmem:[%s1 + $0x478] sm:$0xff]
      %v289 = vld [vmem:[%s1 + $0x480] sm:$0xff]
      %v290 = vld [vmem:[%s1 + $0x488] sm:$0xff]
      %v291 = vld [vmem:[%s1 + $0x490] sm:$0xff]
      %v292 = vld [vmem:[%s1 + $0x498] sm:$0xff]
      %v293 = vld [vmem:[%s1 + $0x4a0] sm:$0xff]
      %v294 = vld [vmem:[%s1 + $0x4a8] sm:$0xff]
      %v295 = vld [vmem:[%s1 + $0x4b0] sm:$0xff]
      %v296 = vld [vmem:[%s1 + $0x4b8] sm:$0xff]
      %v297 = vld [vmem:[%s1 + $0x4c0] sm:$0xff]
      %v298 = vld [vmem:[%s1 + $0x4c8] sm:$0xff]
      %v299 = vld [vmem:[%s1 + $0x4d0] sm:$0xff]
      %v300 = vld [vmem:[%s1 + $0x4d8] sm:$0xff]
      %v301 = vld [vmem:[%s1 + $0x4e0] sm:$0xff]
      %v302 = vld [vmem:[%s1 + $0x4e8] sm:$0xff]
      %v303 = vld [vmem:[%s1 + $0x4f0] sm:$0xff]
      %v304 = vld [vmem:[%s1 + $0x4f8] sm:$0xff]
      %v305 = vld [vmem:[%s1 + $0x500] sm:$0xff]
      %v306 = vld [vmem:[%s1 + $0x508] sm:$0xff]
      %v307 = vld [vmem:[%s1 + $0x510] sm:$0xff]
      %v308 = vld [vmem:[%s1 + $0x518] sm:$0xff]
      %v309 = vld [vmem:[%s1 + $0x520] sm:$0xff]
      %v310 = vld [vmem:[%s1 + $0x528] sm:$0xff]
      %v311 = vld [vmem:[%s1 + $0x530] sm:$0xff]
      %v312 = vld [vmem:[%s1 + $0x538] sm:$0xff]
      %v313 = vld [vmem:[%s1 + $0x540] sm:$0xff]
      %v314 = vld [vmem:[%s1 + $0x548] sm:$0xff]
      %v315 = vld [vmem:[%s1 + $0x550] sm:$0xff]
      %v316 = vld [vmem:[%s1 + $0x558] sm:$0xff]
      %v317 = vld [vmem:[%s1 + $0x560] sm:$0xff]
      %v318 = vld [vmem:[%s1 + $0x568] sm:$0xff]
      %v319 = vld [vmem:[%s1 + $0x570] sm:$0xff]
      %v320 = vld [vmem:[%s1 + $0x578] sm:$0xff]
      %v321 = vld [vmem:[%s1 + $0x580] sm:$0xff]
      %v322 = vld [vmem:[%s1 + $0x588] sm:$0xff]
      %v323 = vld [vmem:[%s1 + $0x590] sm:$0xff]
      %v324 = vld [vmem:[%s1 + $0x598] sm:$0xff]
      %v325 = vld [vmem:[%s1 + $0x5a0] sm:$0xff]
      %v326 = vld [vmem:[%s1 + $0x5a8] sm:$0xff]
      %v327 = vld [vmem:[%s1 + $0x5b0] sm:$0xff]
      %v328 = vld [vmem:[%s1 + $0x5b8] sm:$0xff]
      %v329 = vld [vmem:[%s1 + $0x5c0] sm:$0xff]
      %v330 = vld [vmem:[%s1 + $0x5c8] sm:$0xff]
      %v331 = vld [vmem:[%s1 + $0x5d0] sm:$0xff]
      %v332 = vld [vmem:[%s1 + $0x5d8] sm:$0xff]
      %v333 = vld [vmem:[%s1 + $0x5e0] sm:$0xff]
      %v334 = vld [vmem:[%s1 + $0x5e8] sm:$0xff]
      %v335 = vld [vmem:[%s1 + $0x5f0] sm:$0xff]
      %v336 = vld [vmem:[%s1 + $0x5f8] sm:$0xff]
      %v337 = vld [vmem:[%s1 + $0x600] sm:$0xff]
      %v338 = vld [vmem:[%s1 + $0x608] sm:$0xff]
      %v339 = vld [vmem:[%s1 + $0x610] sm:$0xff]
      %v340 = vld [vmem:[%s1 + $0x618] sm:$0xff]
      %v341 = vld [vmem:[%s1 + $0x620] sm:$0xff]
      %v342 = vld [vmem:[%s1 + $0x628] sm:$0xff]
      %v343 = vld [vmem:[%s1 + $0x630] sm:$0xff]
      %v344 = vld [vmem:[%s1 + $0x638] sm:$0xff]
      %v345 = vld [vmem:[%s1 + $0x640] sm:$0xff]
      %v346 = vld [vmem:[%s1 + $0x648] sm:$0xff]
      %v347 = vld [vmem:[%s1 + $0x650] sm:$0xff]
      %v348 = vld [vmem:[%s1 + $0x658] sm:$0xff]
      %v349 = vld [vmem:[%s1 + $0x660] sm:$0xff]
      %v350 = vld [vmem:[%s1 + $0x668] sm:$0xff]
      %v351 = vld [vmem:[%s1 + $0x670] sm:$0xff]
      %v352 = vld [vmem:[%s1 + $0x678] sm:$0xff]
      %v353 = vld [vmem:[%s1 + $0x680] sm:$0xff]
      %v354 = vld [vmem:[%s1 + $0x688] sm:$0xff]
      %v355 = vld [vmem:[%s1 + $0x690] sm:$0xff]
      %v356 = vld [vmem:[%s1 + $0x698] sm:$0xff]
      %v357 = vld [vmem:[%s1 + $0x6a0] sm:$0xff]
      %v358 = vld [vmem:[%s1 + $0x6a8] sm:$0xff]
      %v359 = vld [vmem:[%s1 + $0x6b0] sm:$0xff]
      %v360 = vld [vmem:[%s1 + $0x6b8] sm:$0xff]
      %v361 = vld [vmem:[%s1 + $0x6c0] sm:$0xff]
      %v362 = vld [vmem:[%s1 + $0x6c8] sm:$0xff]
      %v363 = vld [vmem:[%s1 + $0x6d0] sm:$0xff]
      %v364 = vld [vmem:[%s1 + $0x6d8] sm:$0xff]
      %v365 = vld [vmem:[%s1 + $0x6e0] sm:$0xff]
      %v366 = vld [vmem:[%s1 + $0x6e8] sm:$0xff]
      %v367 = vld [vmem:[%s1 + $0x6f0] sm:$0xff]
      %v368 = vld [vmem:[%s1 + $0x6f8] sm:$0xff]
      %v369 = vld [vmem:[%s1 + $0x700] sm:$0xff]
      %v370 = vld [vmem:[%s1 + $0x708] sm:$0xff]
      %v371 = vld [vmem:[%s1 + $0x710] sm:$0xff]
      %v372 = vld [vmem:[%s1 + $0x718] sm:$0xff]
      %v373 = vld [vmem:[%s1 + $0x720] sm:$0xff]
      %v374 = vld [vmem:[%s1 + $0x728] sm:$0xff]
      %v375 = vld [vmem:[%s1 + $0x730] sm:$0xff]
      %v376 = vld [vmem:[%s1 + $0x738] sm:$0xff]
      %v377 = vld [vmem:[%s1 + $0x740] sm:$0xff]
      %v378 = vld [vmem:[%s1 + $0x748] sm:$0xff]
      %v379 = vld [vmem:[%s1 + $0x750] sm:$0xff]
      %v380 = vld [vmem:[%s1 + $0x758] sm:$0xff]
      %v381 = vld [vmem:[%s1 + $0x760] sm:$0xff]
      %v382 = vld [vmem:[%s1 + $0x768] sm:$0xff]
      %v383 = vld [vmem:[%s1 + $0x770] sm:$0xff]
      %v384 = vld [vmem:[%s1 + $0x778] sm:$0xff]
      %v385 = vld [vmem:[%s1 + $0x780] sm:$0xff]
      %v386 = vld [vmem:[%s1 + $0x788] sm:$0xff]
      %v387 = vld [vmem:[%s1 + $0x790] sm:$0xff]
      %v388 = vld [vmem:[%s1 + $0x798] sm:$0xff]
      %v389 = vld [vmem:[%s1 + $0x7a0] sm:$0xff]
      %v390 = vld [vmem:[%s1 + $0x7a8] sm:$0xff]
      %v391 = vld [vmem:[%s1 + $0x7b0] sm:$0xff]
      %v392 = vld [vmem:[%s1 + $0x7b8] sm:$0xff]
      %v393 = vld [vmem:[%s1 + $0x7c0] sm:$0xff]
      %v394 = vld [vmem:[%s1 + $0x7c8] sm:$0xff]
      %v395 = vld [vmem:[%s1 + $0x7d0] sm:$0xff]
      %v396 = vld [vmem:[%s1 + $0x7d8] sm:$0xff]
      %v397 = vld [vmem:[%s1 + $0x7e0] sm:$0xff]
      %v398 = vld [vmem:[%s1 + $0x7e8] sm:$0xff]
      %v399 = vld [vmem:[%s1 + $0x7f0] sm:$0xff]
      %v400 = vld [vmem:[%s1 + $0x7f8] sm:$0xff]
      %v402 = vcombine.high %v144, %v144
      %404 = vmatprep.subr.mxu0 %v266
      %405 = vmatpush1.msra.mxu0 %v265
      %406 = vmatprep.subr.mxu0 %v258
      %407 = vmatpush1.msra.mxu0 %v257
      %408 = vmatprep.subr.mxu0 %v250
      %409 = vmatpush1.msra.mxu0 %v249
      %410 = vmatprep.subr.mxu0 %v242
      %411 = vmatpush1.msra.mxu0 %v241
      %412 = vmatprep.subr.mxu0 %v234
      %413 = vmatpush1.msra.mxu0 %v233
      %414 = vmatprep.subr.mxu0 %v226
      %415 = vmatpush1.msra.mxu0 %v225
      %416 = vmatprep.subr.mxu0 %v218
      %417 = vmatpush1.msra.mxu0 %v217
      %418 = vmatprep.subr.mxu0 %v210
      %419 = vmatpush1.msra.mxu0 %v209
      %420 = vmatprep.subr.mxu0 %v202
      %421 = vmatpush1.msra.mxu0 %v201
      %422 = vmatprep.subr.mxu0 %v194
      %423 = vmatpush1.msra.mxu0 %v193
      %424 = vmatprep.subr.mxu0 %v186
      %425 = vmatpush1.msra.mxu0 %v185
      %426 = vmatprep.subr.mxu0 %v178
      %427 = vmatpush1.msra.mxu0 %v177
      %428 = vmatprep.subr.mxu0 %v170
      %429 = vmatpush1.msra.mxu0 %v169
      %430 = vmatprep.subr.mxu0 %v162
      %431 = vmatpush1.msra.mxu0 %v161
      %432 = vmatprep.subr.mxu0 %v154
      %433 = vmatpush1.msra.mxu0 %v153
      %434 = vmatprep.subr.mxu0 %v146
      %435 = vmatpush1.msra.mxu0 %v145
      %436 = vmatprep.subr.mxu0 %v394
      %437 = vmatpush2.msra.mxu0 %v393
      %438 = vmatprep.subr.mxu0 %v386
      %439 = vmatpush2.msra.mxu0 %v385
      %440 = vmatprep.subr.mxu0 %v378
      %441 = vmatpush2.msra.mxu0 %v377
      %442 = vmatprep.subr.mxu0 %v370
      %443 = vmatpush2.msra.mxu0 %v369
      %444 = vmatprep.subr.mxu0 %v362
      %445 = vmatpush2.msra.mxu0 %v361
      %446 = vmatprep.subr.mxu0 %v354
      %447 = vmatpush2.msra.mxu0 %v353
      %448 = vmatprep.subr.mxu0 %v346
      %449 = vmatpush2.msra.mxu0 %v345
      %450 = vmatprep.subr.mxu0 %v338
      %451 = vmatpush2.msra.mxu0 %v337
      %452 = vmatprep.subr.mxu0 %v330
      %453 = vmatpush2.msra.mxu0 %v329
      %454 = vmatprep.subr.mxu0 %v322
      %455 = vmatpush2.msra.mxu0 %v321
      %456 = vmatprep.subr.mxu0 %v314
      %457 = vmatpush2.msra.mxu0 %v313
      %458 = vmatprep.subr.mxu0 %v306
      %459 = vmatpush2.msra.mxu0 %v305
      %460 = vmatprep.subr.mxu0 %v298
      %461 = vmatpush2.msra.mxu0 %v297
      %462 = vmatprep.subr.mxu0 %v290
      %463 = vmatpush2.msra.mxu0 %v289
      %464 = vmatprep.subr.mxu0 %v282
      %465 = vmatpush2.msra.mxu0 %v281
      %466 = vmatprep.subr.mxu0 %v274
      %467 = vmatpush2.msra.mxu0 %v273
      %468 = vmatprep.mubr.f32.mxu0 %v402
      %469 = vmatmul.mubr.f32.gmra.mxu0 %v144
      %v470 = vpop.f32.mrf.mxu0
      %v471 = vadd.f32 0.0, %v470
      %v472 = vpop.f32.mrf.mxu0
      %v473 = vadd.f32 0.0, %v472
      %474 = vdwg.mxu0
      %475 = vmatprep.subr.mxu0 %v268
      %476 = vmatpush1.msra.mxu0 %v267
      %477 = vmatprep.subr.mxu0 %v260
      %478 = vmatpush1.msra.mxu0 %v259
      %479 = vmatprep.subr.mxu0 %v252
      %480 = vmatpush1.msra.mxu0 %v251
      %481 = vmatprep.subr.mxu0 %v244
      %482 = vmatpush1.msra.mxu0 %v243
      %483 = vmatprep.subr.mxu0 %v236
      %484 = vmatpush1.msra.mxu0 %v235
      %485 = vmatprep.subr.mxu0 %v228
      %486 = vmatpush1.msra.mxu0 %v227
      %487 = vmatprep.subr.mxu0 %v220
      %488 = vmatpush1.msra.mxu0 %v219
      %489 = vmatprep.subr.mxu0 %v212
      %490 = vmatpush1.msra.mxu0 %v211
      %491 = vmatprep.subr.mxu0 %v204
      %492 = vmatpush1.msra.mxu0 %v203
      %493 = vmatprep.subr.mxu0 %v196
      %494 = vmatpush1.msra.mxu0 %v195
      %495 = vmatprep.subr.mxu0 %v188
      %496 = vmatpush1.msra.mxu0 %v187
      %497 = vmatprep.subr.mxu0 %v180
      %498 = vmatpush1.msra.mxu0 %v179
      %499 = vmatprep.subr.mxu0 %v172
      %500 = vmatpush1.msra.mxu0 %v171
      %501 = vmatprep.subr.mxu0 %v164
      %502 = vmatpush1.msra.mxu0 %v163
      %503 = vmatprep.subr.mxu0 %v156
      %504 = vmatpush1.msra.mxu0 %v155
      %505 = vmatprep.subr.mxu0 %v148
      %506 = vmatpush1.msra.mxu0 %v147
      %507 = vmatprep.subr.mxu0 %v396
      %508 = vmatpush2.msra.mxu0 %v395
      %509 = vmatprep.subr.mxu0 %v388
      %510 = vmatpush2.msra.mxu0 %v387
      %511 = vmatprep.subr.mxu0 %v380
      %512 = vmatpush2.msra.mxu0 %v379
      %513 = vmatprep.subr.mxu0 %v372
      %514 = vmatpush2.msra.mxu0 %v371
      %515 = vmatprep.subr.mxu0 %v364
      %516 = vmatpush2.msra.mxu0 %v363
      %517 = vmatprep.subr.mxu0 %v356
      %518 = vmatpush2.msra.mxu0 %v355
      %519 = vmatprep.subr.mxu0 %v348
      %520 = vmatpush2.msra.mxu0 %v347
      %521 = vmatprep.subr.mxu0 %v340
      %522 = vmatpush2.msra.mxu0 %v339
      %523 = vmatprep.subr.mxu0 %v332
      %524 = vmatpush2.msra.mxu0 %v331
      %525 = vmatprep.subr.mxu0 %v324
      %526 = vmatpush2.msra.mxu0 %v323
      %527 = vmatprep.subr.mxu0 %v316
      %528 = vmatpush2.msra.mxu0 %v315
      %529 = vmatprep.subr.mxu0 %v308
      %530 = vmatpush2.msra.mxu0 %v307
      %531 = vmatprep.subr.mxu0 %v300
      %532 = vmatpush2.msra.mxu0 %v299
      %533 = vmatprep.subr.mxu0 %v292
      %534 = vmatpush2.msra.mxu0 %v291
      %535 = vmatprep.subr.mxu0 %v284
      %536 = vmatpush2.msra.mxu0 %v283
      %537 = vmatprep.subr.mxu0 %v276
      %538 = vmatpush2.msra.mxu0 %v275
      %539 = vmatprep.mubr.f32.mxu0 %v402
      %540 = vmatmul.mubr.f32.gmra.mxu0 %v144
      %v541 = vpop.f32.mrf.mxu0
      %v542 = vadd.f32 0.0, %v541
      %v543 = vpop.f32.mrf.mxu0
      %v544 = vadd.f32 0.0, %v543
      %545 = vdwg.mxu0
      %546 = vmatprep.subr.mxu0 %v270
      %547 = vmatpush1.msra.mxu0 %v269
      %548 = vmatprep.subr.mxu0 %v262
      %549 = vmatpush1.msra.mxu0 %v261
      %550 = vmatprep.subr.mxu0 %v254
      %551 = vmatpush1.msra.mxu0 %v253
      %552 = vmatprep.subr.mxu0 %v246
      %553 = vmatpush1.msra.mxu0 %v245
      %554 = vmatprep.subr.mxu0 %v238
      %555 = vmatpush1.msra.mxu0 %v237
      %556 = vmatprep.subr.mxu0 %v230
      %557 = vmatpush1.msra.mxu0 %v229
      %558 = vmatprep.subr.mxu0 %v222
      %559 = vmatpush1.msra.mxu0 %v221
      %560 = vmatprep.subr.mxu0 %v214
      %561 = vmatpush1.msra.mxu0 %v213
      %562 = vmatprep.subr.mxu0 %v206
      %563 = vmatpush1.msra.mxu0 %v205
      %564 = vmatprep.subr.mxu0 %v198
      %565 = vmatpush1.msra.mxu0 %v197
      %566 = vmatprep.subr.mxu0 %v190
      %567 = vmatpush1.msra.mxu0 %v189
      %568 = vmatprep.subr.mxu0 %v182
      %569 = vmatpush1.msra.mxu0 %v181
      %570 = vmatprep.subr.mxu0 %v174
      %571 = vmatpush1.msra.mxu0 %v173
      %572 = vmatprep.subr.mxu0 %v166
      %573 = vmatpush1.msra.mxu0 %v165
      %574 = vmatprep.subr.mxu0 %v158
      %575 = vmatpush1.msra.mxu0 %v157
      %576 = vmatprep.subr.mxu0 %v150
      %577 = vmatpush1.msra.mxu0 %v149
      %578 = vmatprep.subr.mxu0 %v398
      %579 = vmatpush2.msra.mxu0 %v397
      %580 = vmatprep.subr.mxu0 %v390
      %581 = vmatpush2.msra.mxu0 %v389
      %582 = vmatprep.subr.mxu0 %v382
      %583 = vmatpush2.msra.mxu0 %v381
      %584 = vmatprep.subr.mxu0 %v374
      %585 = vmatpush2.msra.mxu0 %v373
      %586 = vmatprep.subr.mxu0 %v366
      %587 = vmatpush2.msra.mxu0 %v365
      %588 = vmatprep.subr.mxu0 %v358
      %589 = vmatpush2.msra.mxu0 %v357
      %590 = vmatprep.subr.mxu0 %v350
      %591 = vmatpush2.msra.mxu0 %v349
      %592 = vmatprep.subr.mxu0 %v342
      %593 = vmatpush2.msra.mxu0 %v341
      %594 = vmatprep.subr.mxu0 %v334
      %595 = vmatpush2.msra.mxu0 %v333
      %596 = vmatprep.subr.mxu0 %v326
      %597 = vmatpush2.msra.mxu0 %v325
      %598 = vmatprep.subr.mxu0 %v318
      %599 = vmatpush2.msra.mxu0 %v317
      %600 = vmatprep.subr.mxu0 %v310
      %601 = vmatpush2.msra.mxu0 %v309
      %602 = vmatprep.subr.mxu0 %v302
      %603 = vmatpush2.msra.mxu0 %v301
      %604 = vmatprep.subr.mxu0 %v294
      %605 = vmatpush2.msra.mxu0 %v293
      %606 = vmatprep.subr.mxu0 %v286
      %607 = vmatpush2.msra.mxu0 %v285
      %608 = vmatprep.subr.mxu0 %v278
      %609 = vmatpush2.msra.mxu0 %v277
      %610 = vmatprep.mubr.f32.mxu0 %v402
      %611 = vmatmul.mubr.f32.gmra.mxu0 %v144
      %v612 = vpop.f32.mrf.mxu0
      %v613 = vadd.f32 0.0, %v612
      %v614 = vpop.f32.mrf.mxu0
      %v615 = vadd.f32 0.0, %v614
      %616 = vdwg.mxu0
      %617 = vmatprep.subr.mxu0 %v272
      %618 = vmatpush1.msra.mxu0 %v271
      %619 = vmatprep.subr.mxu0 %v264
      %620 = vmatpush1.msra.mxu0 %v263
      %621 = vmatprep.subr.mxu0 %v256
      %622 = vmatpush1.msra.mxu0 %v255
      %623 = vmatprep.subr.mxu0 %v248
      %624 = vmatpush1.msra.mxu0 %v247
      %625 = vmatprep.subr.mxu0 %v240
      %626 = vmatpush1.msra.mxu0 %v239
      %627 = vmatprep.subr.mxu0 %v232
      %628 = vmatpush1.msra.mxu0 %v231
      %629 = vmatprep.subr.mxu0 %v224
      %630 = vmatpush1.msra.mxu0 %v223
      %631 = vmatprep.subr.mxu0 %v216
      %632 = vmatpush1.msra.mxu0 %v215
      %633 = vmatprep.subr.mxu0 %v208
      %634 = vmatpush1.msra.mxu0 %v207
      %635 = vmatprep.subr.mxu0 %v200
      %636 = vmatpush1.msra.mxu0 %v199
      %637 = vmatprep.subr.mxu0 %v192
      %638 = vmatpush1.msra.mxu0 %v191
      %639 = vmatprep.subr.mxu0 %v184
      %640 = vmatpush1.msra.mxu0 %v183
      %641 = vmatprep.subr.mxu0 %v176
      %642 = vmatpush1.msra.mxu0 %v175
      %643 = vmatprep.subr.mxu0 %v168
      %644 = vmatpush1.msra.mxu0 %v167
      %645 = vmatprep.subr.mxu0 %v160
      %646 = vmatpush1.msra.mxu0 %v159
      %647 = vmatprep.subr.mxu0 %v152
      %648 = vmatpush1.msra.mxu0 %v151
      %649 = vmatprep.subr.mxu0 %v400
      %650 = vmatpush2.msra.mxu0 %v399
      %651 = vmatprep.subr.mxu0 %v392
      %652 = vmatpush2.msra.mxu0 %v391
      %653 = vmatprep.subr.mxu0 %v384
      %654 = vmatpush2.msra.mxu0 %v383
      %655 = vmatprep.subr.mxu0 %v376
      %656 = vmatpush2.msra.mxu0 %v375
      %657 = vmatprep.subr.mxu0 %v368
      %658 = vmatpush2.msra.mxu0 %v367
      %659 = vmatprep.subr.mxu0 %v360
      %660 = vmatpush2.msra.mxu0 %v359
      %661 = vmatprep.subr.mxu0 %v352
      %662 = vmatpush2.msra.mxu0 %v351
      %663 = vmatprep.subr.mxu0 %v344
      %664 = vmatpush2.msra.mxu0 %v343
      %665 = vmatprep.subr.mxu0 %v336
      %666 = vmatpush2.msra.mxu0 %v335
      %667 = vmatprep.subr.mxu0 %v328
      %668 = vmatpush2.msra.mxu0 %v327
      %669 = vmatprep.subr.mxu0 %v320
      %670 = vmatpush2.msra.mxu0 %v319
      %671 = vmatprep.subr.mxu0 %v312
      %672 = vmatpush2.msra.mxu0 %v311
      %673 = vmatprep.subr.mxu0 %v304
      %674 = vmatpush2.msra.mxu0 %v303
      %675 = vmatprep.subr.mxu0 %v296
      %676 = vmatpush2.msra.mxu0 %v295
      %677 = vmatprep.subr.mxu0 %v288
      %678 = vmatpush2.msra.mxu0 %v287
      %679 = vmatprep.subr.mxu0 %v280
      %680 = vmatpush2.msra.mxu0 %v279
      %681 = vmatprep.mubr.f32.mxu0 %v402
      %682 = vmatmul.mubr.f32.gmra.mxu0 %v144
      %v683 = vpop.f32.mrf.mxu0
      %v684 = vadd.f32 0.0, %v683
      %v685 = vpop.f32.mrf.mxu0
      %v686 = vadd.f32 0.0, %v685
      %687 = vdwg.mxu0
      %v688 = vlaneseq
      %v689 = vshrl.u32 %v688, 7
      %vm690 = vcmp.eq.s32.totalorder %v689, 0
      %vm691 = vcmp.eq.s32.totalorder %v689, 1
      %v692 = vsel %vm691, 0.017507004, 0.017427675
      %v693 = vsel %vm690, 0.017123288, %v692
      %v694 = vsel %vm691, 2.0444677, 1.8114326
      %v695 = vsel %vm690, 2.117808, %v694
      %v696 = vmul.f32 %v471, %v693
      %v697 = vmul.f32 %v473, %v693
      %v698 = vmul.f32 %v542, %v693
      %v699 = vmul.f32 %v544, %v693
      %v700 = vmul.f32 %v613, %v693
      %v701 = vmul.f32 %v615, %v693
      %v702 = vmul.f32 %v684, %v693
      %v703 = vmul.f32 %v686, %v693
      %v704 = vsub.f32 %v696, %v695
      %v705 = vsub.f32 %v697, %v695
      %v706 = vsub.f32 %v698, %v695
      %v707 = vsub.f32 %v699, %v695
      %v708 = vsub.f32 %v700, %v695
      %v709 = vsub.f32 %v701, %v695
      %v710 = vsub.f32 %v702, %v695
      %v711 = vsub.f32 %v703, %v695
      %v720 = vcombine.low %v704, %v705
      %v721 = vcombine.low %v706, %v707
      %v722 = vcombine.low %v708, %v709
      %v723 = vcombine.low %v710, %v711
      %728 = vst [vmem:[%s143] sm:$0x77] %v720
      %729 = vst [vmem:[%s143 + $0x8] sm:$0x77] %v721
      %730 = vst [vmem:[%s143 + $0x10] sm:$0x77] %v722
      %731 = vst [vmem:[%s143 + $0x18] sm:$0x77] %v723
      %p732 = scmp.lt.s32.totalorder %s13, 1
      %s733 = scalar_select %p732, %s13, 1
      %s734 = smul.addr %s733, 8
      %s735 = smul.addr %s734, 4
      %s736 = scalar_lea.vmem %s2, %s735
      // Predicated region
      $region29: #{fast_base_transform.1} parent=27 // pred_check
        %p737 = pneg %p78
      $region30: #{fast_base_transform.1} parent=27 // pred_check_branch
        %739 = sbr.rel (%p737) target = $region32
      $region31: #{fast_base_transform.1} parent=27 // pred_region
        _
      $region32: #{fast_base_transform.1} parent=27 // pred_fallthru
        _
    $region28: #{fast_base_transform.1} parent=5 // pred_fallthru
      _
    %p740 = scmp.le.s32.totalorder 2, %s8
    // Predicated region
    $region33: #{fast_base_transform.1} parent=5 // pred_check
      %p741 = pneg %p740
    $region34: #{fast_base_transform.1} parent=5 // pred_check_branch
      %743 = sbr.rel (%p741) target = $region36
    $region35: #{fast_base_transform.1} parent=5 // pred_region
      %s744 = ssub.s32 %s8, 2
      // Predicated region
      $region37: #{fast_base_transform.1} parent=35 // pred_check
        %p745 = pneg %p84
      $region38: #{fast_base_transform.1} parent=35 // pred_check_branch
        %747 = sbr.rel (%p745) target = $region40
      $region39: #{fast_base_transform.1} parent=35 // pred_region
        %p748 = scmp.lt.s32.totalorder %s14, 1
        %s749 = scalar_select %p748, %s14, 1
        %s750 = smul.addr %s749, 8
        %s751 = smul.addr %s750, 4
        %s752 = scalar_lea.vmem %s2, %s751
      $region40: #{fast_base_transform.1} parent=35 // pred_fallthru
        _
    $region36: #{fast_base_transform.1} parent=5 // pred_fallthru
      _
  $region6: #{fast_base_transform.1} parent=0 // loop_footer
    %s12 = sadd.s32 1, %s8
  $region7: #{fast_base_transform.1} parent=0 // loop_footer_branch
    %7 = sbr.rel target = $region3
  $region8: #{fast_base_transform.1} parent=0 // loop_exit
    _

</llo_original>
